<compile_context>
chip_gen: v6e
topology: v6e:2x2x1
jax: 0.10.0
libtpu: 0.0.40
codegen_flags: <defaults>
</compile_context>

<pallas_src>
import jax
import jax.numpy as jnp
from jax.experimental import pallas as pl
from jax.experimental.pallas import tpu as pltpu


def _round_up(n: int, m: int) -> int:
    return ((n + m - 1) // m) * m


def dqn_kernel(x_ref, w1_ref, b1_ref, w2_ref, b2_ref, w3_ref, b3_ref, o_ref):
    """One batch tile: fc1 -> relu -> fc2 -> relu -> out, all in VMEM."""
    x = x_ref[...]

    h1 = jnp.dot(x, w1_ref[...], preferred_element_type=jnp.float32) + b1_ref[...]
    h1 = jnp.maximum(h1, 0.0)

    h2 = jnp.dot(h1, w2_ref[...], preferred_element_type=jnp.float32) + b2_ref[...]
    h2 = jnp.maximum(h2, 0.0)

    out = jnp.dot(h2, w3_ref[...], preferred_element_type=jnp.float32) + b3_ref[...]
    o_ref[...] = out.astype(o_ref.dtype)


def dqn_forward(x, params, *, block_b: int = 4096):
    """Forward pass of the DQN MLP.

    x: [B, state_size] float32 (unpadded).
    params: dict with w1/b1/w2/b2/w3/b3; weights stored [in, out], biases [1, out].
    """
    w1, b1 = params["w1"], params["b1"]
    w2, b2 = params["w2"], params["b2"]
    w3, b3 = params["w3"], params["b3"]

    B, S = x.shape
    H1 = w1.shape[1]
    H2 = w2.shape[1]
    A = w3.shape[1]

    # --- balanced batch tiling (only the batch dim is ever padded).
    n_steps = pl.cdiv(B, block_b)
    if n_steps > 1 and n_steps % 2 == 1:
        n_steps += 1                     # even tile count -> v7x megacore balance
    TB = _round_up(pl.cdiv(B, n_steps), 8)
    grid_steps = pl.cdiv(B, TB)
    B_p = grid_steps * TB

    xp = x if B_p == B else jnp.pad(x, ((0, B_p - B), (0, 0)))

    # x / out tiles walk the batch axis; weights & biases are block-constant
    # (same block every grid step -> DMA'd to VMEM once, resident thereafter).
    x_spec = pl.BlockSpec((TB, S), lambda i: (i, 0))
    o_spec = pl.BlockSpec((TB, A), lambda i: (i, 0))
    const2d = lambda shape: pl.BlockSpec(shape, lambda i: (0, 0))

    # CostEstimate from the real (unpadded) dims.
    flops = 2 * B * (S * H1 + H1 * H2 + H2 * A)
    bytes_accessed = 4 * (
        B * S + B * A                         # x in, out
        + S * H1 + H1 * H2 + H2 * A           # weights
        + H1 + H2 + A                         # biases
    )

    out_padded = pl.pallas_call(
        dqn_kernel,
        out_shape=jax.ShapeDtypeStruct((B_p, A), jnp.float32),
        grid=(grid_steps,),
        in_specs=[
            x_spec,
            const2d(w1.shape), const2d(b1.shape),
            const2d(w2.shape), const2d(b2.shape),
            const2d(w3.shape), const2d(b3.shape),
        ],
        out_specs=o_spec,
        compiler_params=pltpu.CompilerParams(
            dimension_semantics=("parallel",),   # shard batch tiles on v7x's 2 TCs
        ),
        cost_estimate=pl.CostEstimate(
            flops=flops, transcendentals=0, bytes_accessed=bytes_accessed
        ),
    )(xp, w1, b1, w2, b2, w3, b3)

    # Only the (tiny) batch tail was padded; slice it back off.
    return out_padded if B_p == B else out_padded[:B]


def init_params(key, state_size, h1_nodes, h2_nodes, action_size):
    """Deterministic synthetic init (uniform, like PyTorch's default Linear init)."""
    ks = jax.random.split(key, 6)

    def linear(kw, kb, fan_in, fan_out):
        bound = 1.0 / jnp.sqrt(fan_in)
        # stored as [in, out] so the kernel does x @ W
        w = jax.random.uniform(kw, (fan_in, fan_out), jnp.float32, -bound, bound)
        b = jax.random.uniform(kb, (1, fan_out), jnp.float32, -bound, bound)
        return w, b

    w1, b1 = linear(ks[0], ks[1], state_size, h1_nodes)
    w2, b2 = linear(ks[2], ks[3], h1_nodes, h2_nodes)
    w3, b3 = linear(ks[4], ks[5], h2_nodes, action_size)
    return {"w1": w1, "b1": b1, "w2": w2, "b2": b2, "w3": w3, "b3": b3}


def dqn_reference(x, p):
    h1 = jnp.maximum(x @ p["w1"] + p["b1"], 0.0)
    h2 = jnp.maximum(h1 @ p["w2"] + p["b2"], 0.0)
    return h2 @ p["w3"] + p["b3"]


if __name__ == "__main__":
    key = jax.random.PRNGKey(0)
    k_params, k_x, k_x_big = jax.random.split(key, 3)

    state_size = 8
    h1_nodes = 32
    h2_nodes = 32
    action_size = 4

    params = init_params(k_params, state_size, h1_nodes, h2_nodes, action_size)

    # Small-batch check (tail / padding path, single grid step).
    batch = 2
    x = jax.random.normal(k_x, (batch, state_size), jnp.float32)
    out = dqn_forward(x, params)
    jax.block_until_ready(out)
    ref = dqn_reference(x, params)
    assert out.shape == (batch, action_size)
    assert jnp.allclose(out, ref, atol=1e-5, rtol=1e-5)

    # Larger ragged batch: multiple balanced grid steps (even count) + small tail pad.
    big_batch = 2500
    xb = jax.random.normal(k_x_big, (big_batch, state_size), jnp.float32)
    out_b = dqn_forward(xb, params, block_b=1024)
    jax.block_until_ready(out_b)
    ref_b = dqn_reference(xb, params)
    assert out_b.shape == (big_batch, action_size)
    assert jnp.allclose(out_b, ref_b, atol=1e-4, rtol=1e-5)

    print("KERNEL_OK")
</pallas_src>

<mosaic_0001>
module attributes {stable_mosaic.version = 11 : i64} {
  func.func @dqn_kernel(%arg0: i32, %arg1: memref<8x8xf32, #tpu.memory_space<vmem>>, %arg2: memref<8x32xf32, #tpu.memory_space<vmem>>, %arg3: memref<1x32xf32, #tpu.memory_space<vmem>>, %arg4: memref<32x32xf32, #tpu.memory_space<vmem>>, %arg5: memref<1x32xf32, #tpu.memory_space<vmem>>, %arg6: memref<32x4xf32, #tpu.memory_space<vmem>>, %arg7: memref<1x4xf32, #tpu.memory_space<vmem>>, %arg8: memref<8x4xf32, #tpu.memory_space<vmem>>) attributes {dimension_semantics = [#tpu.dimension_semantics<parallel>], iteration_bounds = array<i64: 1>, scalar_prefetch = 0 : i64, scratch_operands = 0 : i64, tpu.core_type = #tpu.core_type<tc>, window_params = [{transform_indices = @transform_0, window_bounds = array<i64: 8, 8>}, {pipeline_mode = #tpu.pipeline_mode<synchronous>, transform_indices = @transform_1, window_bounds = array<i64: 8, 32>}, {pipeline_mode = #tpu.pipeline_mode<synchronous>, transform_indices = @transform_2, window_bounds = array<i64: 1, 32>}, {pipeline_mode = #tpu.pipeline_mode<synchronous>, transform_indices = @transform_3, window_bounds = array<i64: 32, 32>}, {pipeline_mode = #tpu.pipeline_mode<synchronous>, transform_indices = @transform_4, window_bounds = array<i64: 1, 32>}, {pipeline_mode = #tpu.pipeline_mode<synchronous>, transform_indices = @transform_5, window_bounds = array<i64: 32, 4>}, {pipeline_mode = #tpu.pipeline_mode<synchronous>, transform_indices = @transform_6, window_bounds = array<i64: 1, 4>}, {transform_indices = @transform_7, window_bounds = array<i64: 8, 4>}]} {
    %c0 = arith.constant 0 : index
    %c0_0 = arith.constant 0 : index
    %0 = vector.load %arg1[%c0, %c0_0] : memref<8x8xf32, #tpu.memory_space<vmem>>, vector<8x8xf32>
    %c0_1 = arith.constant 0 : index
    %c0_2 = arith.constant 0 : index
    %1 = vector.load %arg2[%c0_1, %c0_2] : memref<8x32xf32, #tpu.memory_space<vmem>>, vector<8x32xf32>
    %cst = arith.constant dense<0.000000e+00> : vector<8x32xf32>
    %2 = tpu.matmul %0, %1, %cst {dimension_numbers = #tpu.dot_dimension_numbers<[1], [0], [0], [1], [0, 0, 1, 1], [], []>} : vector<8x8xf32>, vector<8x32xf32>, vector<8x32xf32> -> vector<8x32xf32>
    %c0_3 = arith.constant 0 : index
    %c0_4 = arith.constant 0 : index
    %3 = vector.load %arg3[%c0_3, %c0_4] : memref<1x32xf32, #tpu.memory_space<vmem>>, vector<1x32xf32>
    %4 = vector.broadcast %3 : vector<1x32xf32> to vector<8x32xf32>
    %5 = arith.addf %2, %4 : vector<8x32xf32>
    %cst_5 = arith.constant 0.000000e+00 : f32
    %6 = vector.broadcast %cst_5 : f32 to vector<8x32xf32>
    %7 = arith.maximumf %5, %6 : vector<8x32xf32>
    %c0_6 = arith.constant 0 : index
    %c0_7 = arith.constant 0 : index
    %8 = vector.load %arg4[%c0_6, %c0_7] : memref<32x32xf32, #tpu.memory_space<vmem>>, vector<32x32xf32>
    %cst_8 = arith.constant dense<0.000000e+00> : vector<8x32xf32>
    %9 = tpu.matmul %7, %8, %cst_8 {dimension_numbers = #tpu.dot_dimension_numbers<[1], [0], [0], [1], [0, 0, 1, 1], [], []>} : vector<8x32xf32>, vector<32x32xf32>, vector<8x32xf32> -> vector<8x32xf32>
    %c0_9 = arith.constant 0 : index
    %c0_10 = arith.constant 0 : index
    %10 = vector.load %arg5[%c0_9, %c0_10] : memref<1x32xf32, #tpu.memory_space<vmem>>, vector<1x32xf32>
    %11 = vector.broadcast %10 : vector<1x32xf32> to vector<8x32xf32>
    %12 = arith.addf %9, %11 : vector<8x32xf32>
    %cst_11 = arith.constant 0.000000e+00 : f32
    %13 = vector.broadcast %cst_11 : f32 to vector<8x32xf32>
    %14 = arith.maximumf %12, %13 : vector<8x32xf32>
    %c0_12 = arith.constant 0 : index
    %c0_13 = arith.constant 0 : index
    %15 = vector.load %arg6[%c0_12, %c0_13] : memref<32x4xf32, #tpu.memory_space<vmem>>, vector<32x4xf32>
    %cst_14 = arith.constant dense<0.000000e+00> : vector<8x4xf32>
    %16 = tpu.matmul %14, %15, %cst_14 {dimension_numbers = #tpu.dot_dimension_numbers<[1], [0], [0], [1], [0, 0, 1, 1], [], []>} : vector<8x32xf32>, vector<32x4xf32>, vector<8x4xf32> -> vector<8x4xf32>
    %c0_15 = arith.constant 0 : index
    %c0_16 = arith.constant 0 : index
    %17 = vector.load %arg7[%c0_15, %c0_16] : memref<1x4xf32, #tpu.memory_space<vmem>>, vector<1x4xf32>
    %18 = vector.broadcast %17 : vector<1x4xf32> to vector<8x4xf32>
    %19 = arith.addf %16, %18 : vector<8x4xf32>
    %c0_17 = arith.constant 0 : index
    %c0_18 = arith.constant 0 : index
    %20 = vector.load %arg8[%c0_17, %c0_18] : memref<8x4xf32, #tpu.memory_space<vmem>>, vector<8x4xf32>
    tpu.vector_store %arg8[%c0_17, %c0_18], %19 {strides = array<i32>} : memref<8x4xf32, #tpu.memory_space<vmem>>, vector<8x4xf32>,
    return
  }
  func.func @transform_0(%arg0: i32) -> (i32, i32) {
    %c0_i32 = arith.constant 0 : i32
    %c0_i32_0 = arith.constant 0 : i32
    return %arg0, %c0_i32 : i32, i32
  }
  func.func @transform_1(%arg0: i32) -> (i32, i32) {
    %c0_i32 = arith.constant 0 : i32
    %c0_i32_0 = arith.constant 0 : i32
    %c0_i32_1 = arith.constant 0 : i32
    return %c0_i32, %c0_i32_0 : i32, i32
  }
  func.func @transform_2(%arg0: i32) -> (i32, i32) {
    %c0_i32 = arith.constant 0 : i32
    %c0_i32_0 = arith.constant 0 : i32
    %c0_i32_1 = arith.constant 0 : i32
    return %c0_i32, %c0_i32_0 : i32, i32
  }
  func.func @transform_3(%arg0: i32) -> (i32, i32) {
    %c0_i32 = arith.constant 0 : i32
    %c0_i32_0 = arith.constant 0 : i32
    %c0_i32_1 = arith.constant 0 : i32
    return %c0_i32, %c0_i32_0 : i32, i32
  }
  func.func @transform_4(%arg0: i32) -> (i32, i32) {
    %c0_i32 = arith.constant 0 : i32
    %c0_i32_0 = arith.constant 0 : i32
    %c0_i32_1 = arith.constant 0 : i32
    return %c0_i32, %c0_i32_0 : i32, i32
  }
  func.func @transform_5(%arg0: i32) -> (i32, i32) {
    %c0_i32 = arith.constant 0 : i32
    %c0_i32_0 = arith.constant 0 : i32
    %c0_i32_1 = arith.constant 0 : i32
    return %c0_i32, %c0_i32_0 : i32, i32
  }
  func.func @transform_6(%arg0: i32) -> (i32, i32) {
    %c0_i32 = arith.constant 0 : i32
    %c0_i32_0 = arith.constant 0 : i32
    %c0_i32_1 = arith.constant 0 : i32
    return %c0_i32, %c0_i32_0 : i32, i32
  }
  func.func @transform_7(%arg0: i32) -> (i32, i32) {
    %c0_i32 = arith.constant 0 : i32
    %c0_i32_0 = arith.constant 0 : i32
    return %arg0, %c0_i32 : i32, i32
  }
}

</mosaic_0001>

<llo_original>
// kernel: tpu_custom_call.1
$region0: #{tpu_custom_call.1}
  #allocation0 [shape = 'u32[]', space=smem, size = 0x4, offset = 0x4, fixed_abs, tag = 'smem constant byte address 0x4 - core index']
  #allocation1 [shape = 'u32[144,128]{1,0:T(1,128)}', space=vmem, size = 0x12000, scoped, tag = 'internal scratch']
  %s0 = inlined_call_operand.vmem [shape: f32[8,8], index: 0, kind: input, shape index: {}]
  %s1 = inlined_call_operand.hbm [shape: f32[8,32], index: 1, kind: input, shape index: {}]
  %s2 = inlined_call_operand.vmem [shape: f32[1,32], index: 2, kind: input, shape index: {}]
  %s3 = inlined_call_operand.vmem [shape: f32[32,32], index: 3, kind: input, shape index: {}]
  %s4 = inlined_call_operand.hbm [shape: f32[1,32], index: 4, kind: input, shape index: {}]
  %s5 = inlined_call_operand.vmem [shape: f32[32,4], index: 5, kind: input, shape index: {}]
  %s6 = inlined_call_operand.vmem [shape: f32[1,4], index: 6, kind: input, shape index: {}]
  %s7 = inlined_call_operand.vmem [shape: f32[8,4], index: 7, kind: output, shape index: {}]
  %s8 = sld [smem:[#allocation0]]
  $region46: #{tpu_custom_call.1} parent=0
    _
  %s10 = ssub.s32 1, %s8
  %s11 = scalar_select 0, %s10, %s8
  $region1: #{tpu_custom_call.1} parent=0
    #allocation2 [shape = 'u8[4096]{0}', space=vmem, size = 0x1000, scoped, tag = 'input window, operand 1, single buffered']
    #allocation3 [shape = 's32[1]{0}', space=sflag, size = 0x4, scoped, tag = 'scoped memory for tpu_custom_call.1']
    #allocation4 [shape = 'u8[512]{0}', space=vmem, size = 0x400, scoped, tag = 'input window, operand 4, single buffered']
    #allocation5 [shape = 's32[1]{0}', space=sflag, size = 0x4, scoped, tag = 'scoped memory for tpu_custom_call.1']
    %12 = vsyncpa [#allocation3], 0
    %13 = vsyncpa [#allocation5], 0
    // Predicated region
    $region2: #{tpu_custom_call.1} parent=1 // pred_check
      _
    $region3: #{tpu_custom_call.1} parent=1 // pred_check_branch
      %15 = sbr.rel (0) target = $region5
    $region4: #{tpu_custom_call.1} parent=1 // pred_region
      _
    $region5: #{tpu_custom_call.1} parent=1 // pred_fallthru
      _
    // Predicated region
    $region6: #{tpu_custom_call.1} parent=1 // pred_check
      _
    $region7: #{tpu_custom_call.1} parent=1 // pred_check_branch
      %17 = sbr.rel (0) target = $region9
    $region8: #{tpu_custom_call.1} parent=1 // pred_region
      %s19 = ssub.s32 128, 128
      %20 = vsyncadd [#allocation3], %s19
      %s22 = sshll.u32 [#allocation2], 4
      %s23 = int_to_ptr.vmem [resolvable:$true] %s22
      %25 = dma.hbm_to_vmem [thread:$0]  %s1, 128, %s23, [#allocation3]
    $region9: #{tpu_custom_call.1} parent=1 // pred_fallthru
      _
    // Predicated region
    $region10: #{tpu_custom_call.1} parent=1 // pred_check
      _
    $region11: #{tpu_custom_call.1} parent=1 // pred_check_branch
      %27 = sbr.rel (0) target = $region13
    $region12: #{tpu_custom_call.1} parent=1 // pred_region
      _
    $region13: #{tpu_custom_call.1} parent=1 // pred_fallthru
      _
    // Predicated region
    $region14: #{tpu_custom_call.1} parent=1 // pred_check
      _
    $region15: #{tpu_custom_call.1} parent=1 // pred_check_branch
      %29 = sbr.rel (0) target = $region17
    $region16: #{tpu_custom_call.1} parent=1 // pred_region
      _
    $region17: #{tpu_custom_call.1} parent=1 // pred_fallthru
      _
    // Predicated region
    $region18: #{tpu_custom_call.1} parent=1 // pred_check
      _
    $region19: #{tpu_custom_call.1} parent=1 // pred_check_branch
      %31 = sbr.rel (0) target = $region21
    $region20: #{tpu_custom_call.1} parent=1 // pred_region
      %s33 = ssub.s32 16, 16
      %34 = vsyncadd [#allocation5], %s33
      %s36 = sshll.u32 [#allocation4], 4
      %s37 = int_to_ptr.vmem [resolvable:$true] %s36
      %39 = dma.hbm_to_vmem [thread:$0]  %s4, 16, %s37, [#allocation5]
    $region21: #{tpu_custom_call.1} parent=1 // pred_fallthru
      _
    // Predicated region
    $region22: #{tpu_custom_call.1} parent=1 // pred_check
      _
    $region23: #{tpu_custom_call.1} parent=1 // pred_check_branch
      %41 = sbr.rel (0) target = $region25
    $region24: #{tpu_custom_call.1} parent=1 // pred_region
      _
    $region25: #{tpu_custom_call.1} parent=1 // pred_fallthru
      _
    // Predicated region
    $region26: #{tpu_custom_call.1} parent=1 // pred_check
      _
    $region27: #{tpu_custom_call.1} parent=1 // pred_check_branch
      %43 = sbr.rel (0) target = $region29
    $region28: #{tpu_custom_call.1} parent=1 // pred_region
      _
    $region29: #{tpu_custom_call.1} parent=1 // pred_fallthru
      _
    // Predicated region
    $region30: #{tpu_custom_call.1} parent=1 // pred_check
      _
    $region31: #{tpu_custom_call.1} parent=1 // pred_check_branch
      %45 = sbr.rel (0) target = $region33
    $region32: #{tpu_custom_call.1} parent=1 // pred_region
      %46 = dma.done [#allocation3], 128
    $region33: #{tpu_custom_call.1} parent=1 // pred_fallthru
      _
    // Predicated region
    $region34: #{tpu_custom_call.1} parent=1 // pred_check
      _
    $region35: #{tpu_custom_call.1} parent=1 // pred_check_branch
      %48 = sbr.rel (0) target = $region37
    $region36: #{tpu_custom_call.1} parent=1 // pred_region
      %49 = dma.done [#allocation5], 16
    $region37: #{tpu_custom_call.1} parent=1 // pred_fallthru
      _
    %v50 = vld [vmem:[%s0] sm:$0xff]
    %v51 = vld [vmem:[#allocation2] sm:$0xff]
    %v52 = vld [vmem:[%s2] sm:$0x1]
    %v54 = vlaneseq
    %v55 = vshrl.u32 %v54, 7
    %v56 = vsub.s32 0, %v55
    %v57 = vrot.slane %v52, %v56
    %vm59 = vcmask 64512
    %v61 = vsel %vm59, %v50, 0
    %63 = vmatprep.subr.mxu0 0.0
    %64 = vmatpush1.msra.mxu0 0.0
    %65 = vmatprep.subr.mxu0 0.0
    %66 = vmatpush1.msra.mxu0 0.0
    %67 = vmatprep.subr.mxu0 0.0
    %68 = vmatpush1.msra.mxu0 0.0
    %69 = vmatprep.subr.mxu0 0.0
    %70 = vmatpush1.msra.mxu0 0.0
    %71 = vmatprep.subr.mxu0 0.0
    %72 = vmatpush1.msra.mxu0 0.0
    %73 = vmatprep.subr.mxu0 0.0
    %74 = vmatpush1.msra.mxu0 0.0
    %75 = vmatprep.subr.mxu0 0.0
    %76 = vmatpush1.msra.mxu0 0.0
    %77 = vmatprep.subr.mxu0 0.0
    %78 = vmatpush1.msra.mxu0 0.0
    %79 = vmatprep.subr.mxu0 0.0
    %80 = vmatpush1.msra.mxu0 0.0
    %81 = vmatprep.subr.mxu0 0.0
    %82 = vmatpush1.msra.mxu0 0.0
    %83 = vmatprep.subr.mxu0 0.0
    %84 = vmatpush1.msra.mxu0 0.0
    %85 = vmatprep.subr.mxu0 0.0
    %86 = vmatpush1.msra.mxu0 0.0
    %87 = vmatprep.subr.mxu0 0.0
    %88 = vmatpush1.msra.mxu0 0.0
    %89 = vmatprep.subr.mxu0 0.0
    %90 = vmatpush1.msra.mxu0 0.0
    %91 = vmatprep.subr.mxu0 0.0
    %92 = vmatpush1.msra.mxu0 0.0
    %93 = vmatprep.subr.mxu0 0.0
    %94 = vmatpush1.msra.mxu0 %v51
    %95 = vmatprep.subr.mxu0 0.0
    %96 = vmatpush2.msra.mxu0 0.0
    %97 = vmatprep.subr.mxu0 0.0
    %98 = vmatpush2.msra.mxu0 0.0
    %99 = vmatprep.subr.mxu0 0.0
    %100 = vmatpush2.msra.mxu0 0.0
    %101 = vmatprep.subr.mxu0 0.0
    %102 = vmatpush2.msra.mxu0 0.0
    %103 = vmatprep.subr.mxu0 0.0
    %104 = vmatpush2.msra.mxu0 0.0
    %105 = vmatprep.subr.mxu0 0.0
    %106 = vmatpush2.msra.mxu0 0.0
    %107 = vmatprep.subr.mxu0 0.0
    %108 = vmatpush2.msra.mxu0 0.0
    %109 = vmatprep.subr.mxu0 0.0
    %110 = vmatpush2.msra.mxu0 0.0
    %111 = vmatprep.subr.mxu0 0.0
    %112 = vmatpush2.msra.mxu0 0.0
    %113 = vmatprep.subr.mxu0 0.0
    %114 = vmatpush2.msra.mxu0 0.0
    %115 = vmatprep.subr.mxu0 0.0
    %116 = vmatpush2.msra.mxu0 0.0
    %117 = vmatprep.subr.mxu0 0.0
    %118 = vmatpush2.msra.mxu0 0.0
    %119 = vmatprep.subr.mxu0 0.0
    %120 = vmatpush2.msra.mxu0 0.0
    %121 = vmatprep.subr.mxu0 0.0
    %122 = vmatpush2.msra.mxu0 0.0
    %123 = vmatprep.subr.mxu0 0.0
    %124 = vmatpush2.msra.mxu0 0.0
    %125 = vmatprep.subr.mxu0 0.0
    %126 = vmatpush2.msra.mxu0 0.0
    %127 = vmatprep.mubr.f32.mxu0 0.0
    %128 = vmatmul.mubr.f32.gmra.mxu0 %v61
    %v129 = vpop.f32.mrf.mxu0
    %v130 = vadd.f32 %v57, %v129
    %v131 = vpop.f32.mrf.mxu0
    %132 = vdwg.mxu0
    %v133 = vmax.f32 %v130, 0.0
    %v134 = vld [vmem:[%s3] sm:$0xff]
    %v135 = vld [vmem:[%s3 + $0x8] sm:$0xff]
    %v136 = vld [vmem:[%s3 + $0x10] sm:$0xff]
    %v137 = vld [vmem:[%s3 + $0x18] sm:$0xff]
    %v138 = vld [vmem:[#allocation4] sm:$0x1]
    %v140 = vlaneseq
    %v141 = vshrl.u32 %v140, 7
    %v142 = vsub.s32 0, %v141
    %v143 = vrot.slane %v138, %v142
    %vm145 = vcmask 261120
    %v147 = vsel %vm145, %v133, 0
    %149 = vmatprep.subr.mxu0 0.0
    %150 = vmatpush1.msra.mxu0 0.0
    %151 = vmatprep.subr.mxu0 0.0
    %152 = vmatpush1.msra.mxu0 0.0
    %153 = vmatprep.subr.mxu0 0.0
    %154 = vmatpush1.msra.mxu0 0.0
    %155 = vmatprep.subr.mxu0 0.0
    %156 = vmatpush1.msra.mxu0 0.0
    %157 = vmatprep.subr.mxu0 0.0
    %158 = vmatpush1.msra.mxu0 0.0
    %159 = vmatprep.subr.mxu0 0.0
    %160 = vmatpush1.msra.mxu0 0.0
    %161 = vmatprep.subr.mxu0 0.0
    %162 = vmatpush1.msra.mxu0 0.0
    %163 = vmatprep.subr.mxu0 0.0
    %164 = vmatpush1.msra.mxu0 0.0
    %165 = vmatprep.subr.mxu0 0.0
    %166 = vmatpush1.msra.mxu0 0.0
    %167 = vmatprep.subr.mxu0 0.0
    %168 = vmatpush1.msra.mxu0 0.0
    %169 = vmatprep.subr.mxu0 0.0
    %170 = vmatpush1.msra.mxu0 0.0
    %171 = vmatprep.subr.mxu0 0.0
    %172 = vmatpush1.msra.mxu0 0.0
    %173 = vmatprep.subr.mxu0 0.0
    %174 = vmatpush1.msra.mxu0 %v137
    %175 = vmatprep.subr.mxu0 0.0
    %176 = vmatpush1.msra.mxu0 %v136
    %177 = vmatprep.subr.mxu0 0.0
    %178 = vmatpush1.msra.mxu0 %v135
    %179 = vmatprep.subr.mxu0 0.0
    %180 = vmatpush1.msra.mxu0 %v134
    %181 = vmatprep.subr.mxu0 0.0
    %182 = vmatpush2.msra.mxu0 0.0
    %183 = vmatprep.subr.mxu0 0.0
    %184 = vmatpush2.msra.mxu0 0.0
    %185 = vmatprep.subr.mxu0 0.0
    %186 = vmatpush2.msra.mxu0 0.0
    %187 = vmatprep.subr.mxu0 0.0
    %188 = vmatpush2.msra.mxu0 0.0
    %189 = vmatprep.subr.mxu0 0.0
    %190 = vmatpush2.msra.mxu0 0.0
    %191 = vmatprep.subr.mxu0 0.0
    %192 = vmatpush2.msra.mxu0 0.0
    %193 = vmatprep.subr.mxu0 0.0
    %194 = vmatpush2.msra.mxu0 0.0
    %195 = vmatprep.subr.mxu0 0.0
    %196 = vmatpush2.msra.mxu0 0.0
    %197 = vmatprep.subr.mxu0 0.0
    %198 = vmatpush2.msra.mxu0 0.0
    %199 = vmatprep.subr.mxu0 0.0
    %200 = vmatpush2.msra.mxu0 0.0
    %201 = vmatprep.subr.mxu0 0.0
    %202 = vmatpush2.msra.mxu0 0.0
    %203 = vmatprep.subr.mxu0 0.0
    %204 = vmatpush2.msra.mxu0 0.0
    %205 = vmatprep.subr.mxu0 0.0
    %206 = vmatpush2.msra.mxu0 0.0
    %207 = vmatprep.subr.mxu0 0.0
    %208 = vmatpush2.msra.mxu0 0.0
    %209 = vmatprep.subr.mxu0 0.0
    %210 = vmatpush2.msra.mxu0 0.0
    %211 = vmatprep.subr.mxu0 0.0
    %212 = vmatpush2.msra.mxu0 0.0
    %213 = vmatprep.mubr.f32.mxu0 0.0
    %214 = vmatmul.mubr.f32.gmra.mxu0 %v147
    %v215 = vpop.f32.mrf.mxu0
    %v216 = vadd.f32 %v143, %v215
    %v217 = vpop.f32.mrf.mxu0
    %218 = vdwg.mxu0
    %v219 = vmax.f32 %v216, 0.0
    %v220 = vld [vmem:[%s5] sm:$0xff]
    %v221 = vld [vmem:[%s5 + $0x8] sm:$0xff]
    %v222 = vld [vmem:[%s5 + $0x10] sm:$0xff]
    %v223 = vld [vmem:[%s5 + $0x18] sm:$0xff]
    %v224 = vld [vmem:[%s6] sm:$0x1]
    %v226 = vlaneseq
    %v227 = vshrl.u32 %v226, 7
    %v228 = vsub.s32 0, %v227
    %v229 = vrot.slane %v224, %v228
    %v232 = vsel %vm145, %v219, 0
    %234 = vmatprep.subr.mxu0 0.0
    %235 = vmatpush1.msra.mxu0 0.0
    %236 = vmatprep.subr.mxu0 0.0
    %237 = vmatpush1.msra.mxu0 0.0
    %238 = vmatprep.subr.mxu0 0.0
    %239 = vmatpush1.msra.mxu0 0.0
    %240 = vmatprep.subr.mxu0 0.0
    %241 = vmatpush1.msra.mxu0 0.0
    %242 = vmatprep.subr.mxu0 0.0
    %243 = vmatpush1.msra.mxu0 0.0
    %244 = vmatprep.subr.mxu0 0.0
    %245 = vmatpush1.msra.mxu0 0.0
    %246 = vmatprep.subr.mxu0 0.0
    %247 = vmatpush1.msra.mxu0 0.0
    %248 = vmatprep.subr.mxu0 0.0
    %249 = vmatpush1.msra.mxu0 0.0
    %250 = vmatprep.subr.mxu0 0.0
    %251 = vmatpush1.msra.mxu0 0.0
    %252 = vmatprep.subr.mxu0 0.0
    %253 = vmatpush1.msra.mxu0 0.0
    %254 = vmatprep.subr.mxu0 0.0
    %255 = vmatpush1.msra.mxu0 0.0
    %256 = vmatprep.subr.mxu0 0.0
    %257 = vmatpush1.msra.mxu0 0.0
    %258 = vmatprep.subr.mxu0 0.0
    %259 = vmatpush1.msra.mxu0 %v223
    %260 = vmatprep.subr.mxu0 0.0
    %261 = vmatpush1.msra.mxu0 %v222
    %262 = vmatprep.subr.mxu0 0.0
    %263 = vmatpush1.msra.mxu0 %v221
    %264 = vmatprep.subr.mxu0 0.0
    %265 = vmatpush1.msra.mxu0 %v220
    %266 = vmatprep.subr.mxu0 0.0
    %267 = vmatpush2.msra.mxu0 0.0
    %268 = vmatprep.subr.mxu0 0.0
    %269 = vmatpush2.msra.mxu0 0.0
    %270 = vmatprep.subr.mxu0 0.0
    %271 = vmatpush2.msra.mxu0 0.0
    %272 = vmatprep.subr.mxu0 0.0
    %273 = vmatpush2.msra.mxu0 0.0
    %274 = vmatprep.subr.mxu0 0.0
    %275 = vmatpush2.msra.mxu0 0.0
    %276 = vmatprep.subr.mxu0 0.0
    %277 = vmatpush2.msra.mxu0 0.0
    %278 = vmatprep.subr.mxu0 0.0
    %279 = vmatpush2.msra.mxu0 0.0
    %280 = vmatprep.subr.mxu0 0.0
    %281 = vmatpush2.msra.mxu0 0.0
    %282 = vmatprep.subr.mxu0 0.0
    %283 = vmatpush2.msra.mxu0 0.0
    %284 = vmatprep.subr.mxu0 0.0
    %285 = vmatpush2.msra.mxu0 0.0
    %286 = vmatprep.subr.mxu0 0.0
    %287 = vmatpush2.msra.mxu0 0.0
    %288 = vmatprep.subr.mxu0 0.0
    %289 = vmatpush2.msra.mxu0 0.0
    %290 = vmatprep.subr.mxu0 0.0
    %291 = vmatpush2.msra.mxu0 0.0
    %292 = vmatprep.subr.mxu0 0.0
    %293 = vmatpush2.msra.mxu0 0.0
    %294 = vmatprep.subr.mxu0 0.0
    %295 = vmatpush2.msra.mxu0 0.0
    %296 = vmatprep.subr.mxu0 0.0
    %297 = vmatpush2.msra.mxu0 0.0
    %298 = vmatprep.mubr.f32.mxu0 0.0
    %299 = vmatmul.mubr.f32.gmra.mxu0 %v232
    %v300 = vpop.f32.mrf.mxu0
    %v301 = vadd.f32 %v229, %v300
    %v302 = vpop.f32.mrf.mxu0
    %303 = vdwg.mxu0
    %vm304 = vcmask 31744
    %305 = vst.msk [vmem:[%s7] sm:$0xff] %vm304, %v301
    // Predicated region
    $region38: #{tpu_custom_call.1} parent=1 // pred_check
      _
    $region39: #{tpu_custom_call.1} parent=1 // pred_check_branch
      %307 = sbr.rel (0) target = $region41
    $region40: #{tpu_custom_call.1} parent=1 // pred_region
      _
    $region41: #{tpu_custom_call.1} parent=1 // pred_fallthru
      _
    // Predicated region
    $region42: #{tpu_custom_call.1} parent=1 // pred_check
      _
    $region43: #{tpu_custom_call.1} parent=1 // pred_check_branch
      %309 = sbr.rel (0) target = $region45
    $region44: #{tpu_custom_call.1} parent=1 // pred_region
      _
    $region45: #{tpu_custom_call.1} parent=1 // pred_fallthru
      _
    %310 = vsyncpa [#allocation3], 1
    %311 = vsyncpa [#allocation5], 1

</llo_original>
